<compile_context>
chip_gen: v6e
topology: v6e:2x2x1
jax: 0.10.0
libtpu: 0.0.40
codegen_flags: <defaults>
</compile_context>

<pallas_src>
import math

import jax
import jax.numpy as jnp
from jax.experimental import pallas as pl
from jax.experimental.pallas import tpu as pltpu


def _round_up(x, m):
    return (x + m - 1) // m * m


def _choose_tile(size, align, pref, max_single):
    """Pick a tile for one dim: full (aligned) extent if small enough,
    otherwise ~`pref`-sized balanced blocks with minimal padding."""
    aligned = _round_up(size, align)
    if aligned <= max_single:
        return aligned
    nblk = pl.cdiv(aligned, pref)
    return _round_up(pl.cdiv(aligned, nblk), align)


def _custom_linear_kernel(x_ref, b_ref, w_ref, o_ref, acc_ref):
    k = pl.program_id(2)

    @pl.when(k == 0)
    def _():
        acc_ref[...] = jnp.zeros_like(acc_ref)

    # Bias add in f32 on the VPU (rides free under the MXU), then cast the
    # LHS operand to the weight's streaming dtype for the MXU.
    shifted = (x_ref[...] + b_ref[...]).astype(w_ref.dtype)          # [tm, tk]
    acc_ref[...] += jnp.dot(shifted, w_ref[...],
                            preferred_element_type=jnp.float32)      # [tm, tn]

    @pl.when(k == pl.num_programs(2) - 1)
    def _():
        o_ref[...] = acc_ref[...].astype(o_ref.dtype)


def custom_linear(x, bias, weight, *, mxu_dtype=jnp.bfloat16):
    """out = (x + bias) @ weight via a tiled Pallas TPU kernel."""
    B, I = x.shape
    I2, O = weight.shape
    assert I == I2 and bias.shape == (B, I)

    # Tile choices: sublane dims 8-aligned, lane dims 128-aligned.
    tm = _choose_tile(B, align=8,   pref=256, max_single=256)
    tn = _choose_tile(O, align=128, pref=512, max_single=1024)
    tk = _choose_tile(I, align=128, pref=512, max_single=1024)

    Mp = _round_up(B, tm)
    Kp = _round_up(I, tk)
    Np = _round_up(O, tn)

    # Zero padding: padded K columns contribute 0 to the dot product; padded
    # M rows / N columns are sliced off below.  Skip the pad when it's a no-op.
    def _pad(a, rows, cols):
        if a.shape == (rows, cols):
            return a
        return jnp.pad(a, ((0, rows - a.shape[0]), (0, cols - a.shape[1])))

    x_p = _pad(x.astype(jnp.float32), Mp, Kp)
    b_p = _pad(bias.astype(jnp.float32), Mp, Kp)
    w_p = _pad(weight, Kp, Np).astype(mxu_dtype)

    grid = (Mp // tm, Np // tn, Kp // tk)

    w_bytes = jnp.dtype(mxu_dtype).itemsize
    cost = pl.CostEstimate(
        flops=2 * Mp * Np * Kp,
        transcendentals=0,
        bytes_accessed=(2 * Mp * Kp * 4) + (Kp * Np * w_bytes) + (Mp * Np * 4),
    )

    out_p = pl.pallas_call(
        _custom_linear_kernel,
        out_shape=jax.ShapeDtypeStruct((Mp, Np), jnp.float32),
        grid=grid,
        in_specs=[
            pl.BlockSpec((tm, tk), lambda i, j, k: (i, k)),   # x
            pl.BlockSpec((tm, tk), lambda i, j, k: (i, k)),   # bias
            pl.BlockSpec((tk, tn), lambda i, j, k: (k, j)),   # weight
        ],
        out_specs=pl.BlockSpec((tm, tn), lambda i, j, k: (i, j)),
        scratch_shapes=[pltpu.VMEM((tm, tn), jnp.float32)],
        compiler_params=pltpu.CompilerParams(
            dimension_semantics=("parallel", "parallel", "arbitrary"),
            vmem_limit_bytes=32 * 1024 * 1024,
        ),
        cost_estimate=cost,
    )(x_p, b_p, w_p)

    return out_p[:B, :O]


def init_params(key, input_size, output_size, batch_size):
    """Deterministic parameter init matching the PyTorch module."""
    # xavier_uniform_: U(-a, a), a = sqrt(6 / (fan_in + fan_out))
    limit = math.sqrt(6.0 / (input_size + output_size))
    weight = jax.random.uniform(
        key, (input_size, output_size), dtype=jnp.float32,
        minval=-limit, maxval=limit,
    )
    bias = jnp.zeros((batch_size, input_size), dtype=jnp.float32)
    return weight, bias


if __name__ == "__main__":
    # --- Small shape matching the module (per-sample bias, zeros init). ---
    B, I, O = 8, 32, 16
    k_w, k_x = jax.random.split(jax.random.PRNGKey(0))
    weight, bias = init_params(k_w, I, O, B)
    x = jax.random.normal(k_x, (B, I), dtype=jnp.float32)

    ref = (x + bias) @ weight

    out_f32 = jax.block_until_ready(
        custom_linear(x, bias, weight, mxu_dtype=jnp.float32))
    assert out_f32.shape == (B, O)
    assert jnp.allclose(out_f32, ref, atol=1e-5, rtol=1e-5)

    out_bf16 = jax.block_until_ready(custom_linear(x, bias, weight))  # bf16 MXU
    assert jnp.allclose(out_bf16, ref, atol=5e-2, rtol=5e-2)

    # --- Moderate shape: exercises the multi-tile (M, N, K) grid, the K-axis
    #     accumulator, lane-exact N tiling (640 = 5*128), and a non-zero
    #     per-sample bias. ---
    B2, I2, O2 = 100, 2560, 640
    k_w2, k_x2, k_b2 = jax.random.split(jax.random.PRNGKey(1), 3)
    limit2 = math.sqrt(6.0 / (I2 + O2))
    w2 = jax.random.uniform(k_w2, (I2, O2), jnp.float32, -limit2, limit2)
    b2 = 0.1 * jax.random.normal(k_b2, (B2, I2), dtype=jnp.float32)
    x2 = jax.random.normal(k_x2, (B2, I2), dtype=jnp.float32)

    ref2 = (x2 + b2) @ w2

    out2_f32 = jax.block_until_ready(
        custom_linear(x2, b2, w2, mxu_dtype=jnp.float32))
    assert out2_f32.shape == (B2, O2)
    assert jnp.allclose(out2_f32, ref2, atol=5e-2, rtol=5e-2)

    out2_bf16 = jax.block_until_ready(custom_linear(x2, b2, w2))
    assert jnp.allclose(out2_bf16, ref2, atol=5e-2, rtol=5e-2)

    print("KERNEL_OK")
</pallas_src>

<mosaic_0001>
module attributes {stable_mosaic.version = 11 : i64} {
  func.func @_custom_linear_kernel(%arg0: i32, %arg1: i32, %arg2: i32, %arg3: memref<8x128xf32, #tpu.memory_space<vmem>>, %arg4: memref<8x128xf32, #tpu.memory_space<vmem>>, %arg5: memref<128x128xf32, #tpu.memory_space<vmem>>, %arg6: memref<8x128xf32, #tpu.memory_space<vmem>>, %arg7: memref<8x128xf32, #tpu.memory_space<vmem>>) attributes {dimension_semantics = [#tpu.dimension_semantics<parallel>, #tpu.dimension_semantics<parallel>, #tpu.dimension_semantics<arbitrary>], iteration_bounds = array<i64: 1, 1, 1>, scalar_prefetch = 0 : i64, scratch_operands = 1 : i64, tpu.core_type = #tpu.core_type<tc>, window_params = [{transform_indices = @transform_0, window_bounds = array<i64: 8, 128>}, {transform_indices = @transform_1, window_bounds = array<i64: 8, 128>}, {transform_indices = @transform_2, window_bounds = array<i64: 128, 128>}, {transform_indices = @transform_3, window_bounds = array<i64: 8, 128>}]} {
    %c0_i32 = arith.constant 0 : i32
    %0 = arith.cmpi eq, %arg2, %c0_i32 : i32
    %1 = arith.extui %0 : i1 to i32
    %c0_i32_0 = arith.constant 0 : i32
    %2 = arith.cmpi ne, %1, %c0_i32_0 : i32
    scf.if %2 {
      %cst_12 = arith.constant 0.000000e+00 : f32
      %14 = vector.broadcast %cst_12 : f32 to vector<8x128xf32>
      %c0_13 = arith.constant 0 : index
      %c0_14 = arith.constant 0 : index
      %15 = vector.load %arg7[%c0_13, %c0_14] : memref<8x128xf32, #tpu.memory_space<vmem>>, vector<8x128xf32>
      tpu.vector_store %arg7[%c0_13, %c0_14], %14 {strides = array<i32>} : memref<8x128xf32, #tpu.memory_space<vmem>>, vector<8x128xf32>,
    } else {
    }
    %c0 = arith.constant 0 : index
    %c0_1 = arith.constant 0 : index
    %3 = vector.load %arg3[%c0, %c0_1] : memref<8x128xf32, #tpu.memory_space<vmem>>, vector<8x128xf32>
    %c0_2 = arith.constant 0 : index
    %c0_3 = arith.constant 0 : index
    %4 = vector.load %arg4[%c0_2, %c0_3] : memref<8x128xf32, #tpu.memory_space<vmem>>, vector<8x128xf32>
    %5 = arith.addf %3, %4 : vector<8x128xf32>
    %c0_4 = arith.constant 0 : index
    %c0_5 = arith.constant 0 : index
    %6 = vector.load %arg7[%c0_4, %c0_5] : memref<8x128xf32, #tpu.memory_space<vmem>>, vector<8x128xf32>
    %c0_6 = arith.constant 0 : index
    %c0_7 = arith.constant 0 : index
    %7 = vector.load %arg5[%c0_6, %c0_7] : memref<128x128xf32, #tpu.memory_space<vmem>>, vector<128x128xf32>
    %cst = arith.constant dense<0.000000e+00> : vector<8x128xf32>
    %8 = tpu.matmul %5, %7, %cst {dimension_numbers = #tpu.dot_dimension_numbers<[1], [0], [0], [1], [0, 0, 1, 1], [], []>} : vector<8x128xf32>, vector<128x128xf32>, vector<8x128xf32> -> vector<8x128xf32>
    %9 = arith.addf %6, %8 : vector<8x128xf32>
    %c0_8 = arith.constant 0 : index
    %c0_9 = arith.constant 0 : index
    %10 = vector.load %arg7[%c0_8, %c0_9] : memref<8x128xf32, #tpu.memory_space<vmem>>, vector<8x128xf32>
    tpu.vector_store %arg7[%c0_8, %c0_9], %9 {strides = array<i32>} : memref<8x128xf32, #tpu.memory_space<vmem>>, vector<8x128xf32>,
    %c0_i32_10 = arith.constant 0 : i32
    %11 = arith.cmpi eq, %arg2, %c0_i32_10 : i32
    %12 = arith.extui %11 : i1 to i32
    %c0_i32_11 = arith.constant 0 : i32
    %13 = arith.cmpi ne, %12, %c0_i32_11 : i32
    scf.if %13 {
      %c0_12 = arith.constant 0 : index
      %c0_13 = arith.constant 0 : index
      %14 = vector.load %arg7[%c0_12, %c0_13] : memref<8x128xf32, #tpu.memory_space<vmem>>, vector<8x128xf32>
      %c0_14 = arith.constant 0 : index
      %c0_15 = arith.constant 0 : index
      %15 = vector.load %arg6[%c0_14, %c0_15] : memref<8x128xf32, #tpu.memory_space<vmem>>, vector<8x128xf32>
      tpu.vector_store %arg6[%c0_14, %c0_15], %14 {strides = array<i32>} : memref<8x128xf32, #tpu.memory_space<vmem>>, vector<8x128xf32>,
    } else {
    }
    return
  }
  func.func @transform_0(%arg0: i32, %arg1: i32, %arg2: i32) -> (i32, i32) {
    %c0_i32 = arith.constant 0 : i32
    return %arg0, %arg2 : i32, i32
  }
  func.func @transform_1(%arg0: i32, %arg1: i32, %arg2: i32) -> (i32, i32) {
    %c0_i32 = arith.constant 0 : i32
    return %arg0, %arg2 : i32, i32
  }
  func.func @transform_2(%arg0: i32, %arg1: i32, %arg2: i32) -> (i32, i32) {
    %c0_i32 = arith.constant 0 : i32
    return %arg2, %arg1 : i32, i32
  }
  func.func @transform_3(%arg0: i32, %arg1: i32, %arg2: i32) -> (i32, i32) {
    %c0_i32 = arith.constant 0 : i32
    return %arg0, %arg1 : i32, i32
  }
}

</mosaic_0001>

<llo_original>
// kernel: tpu_custom_call.1
$region0: #{tpu_custom_call.1}
  #allocation0 [shape = 'u32[]', space=smem, size = 0x4, offset = 0x4, fixed_abs, tag = 'smem constant byte address 0x4 - core index']
  #allocation1 [shape = 'u32[144,128]{1,0:T(1,128)}', space=vmem, size = 0x12000, scoped, tag = 'internal scratch']
  #allocation2 [shape = 'f32[8,128]{1,0:T(8,128)}', space=vmem, size = 0x1000, scoped, tag = 'scratch operand']
  %s0 = inlined_call_operand.hbm [shape: f32[8,128], index: 0, kind: input, shape index: {}]
  %s1 = inlined_call_operand.hbm [shape: f32[8,128], index: 1, kind: input, shape index: {}]
  %s2 = inlined_call_operand.hbm [shape: f32[128,128], index: 2, kind: input, shape index: {}]
  %s3 = inlined_call_operand.hbm [shape: f32[8,128], index: 3, kind: output, shape index: {}]
  %s4 = sld [smem:[#allocation0]]
  $region42: #{tpu_custom_call.1} parent=0
    _
  %s6 = ssub.s32 1, %s4
  %s7 = scalar_select 0, %s6, %s4
  $region1: #{tpu_custom_call.1} parent=0
    #allocation3 [shape = 'u8[4096]{0}', space=vmem, size = 0x1000, scoped, tag = 'input window, operand 0, single buffered']
    #allocation4 [shape = 's32[1]{0}', space=sflag, size = 0x4, scoped, tag = 'scoped memory for tpu_custom_call.1']
    #allocation5 [shape = 's32[1]{0}', space=sflag, size = 0x4, scoped, tag = 'scoped memory for tpu_custom_call.1']
    #allocation6 [shape = 'u8[4096]{0}', space=vmem, size = 0x1000, scoped, tag = 'input window, operand 1, single buffered']
    #allocation7 [shape = 's32[1]{0}', space=sflag, size = 0x4, scoped, tag = 'scoped memory for tpu_custom_call.1']
    #allocation8 [shape = 'u8[65536]{0}', space=vmem, size = 0x10000, scoped, tag = 'input window, operand 2, single buffered']
    #allocation9 [shape = 'u8[4096]{0}', space=vmem, size = 0x1000, scoped, tag = 'output window, operand 0, single buffered']
    %8 = vsyncpa [#allocation4], 0
    %9 = vsyncpa [#allocation7], 0
    %10 = vsyncpa [#allocation5], 0
    // Predicated region
    $region2: #{tpu_custom_call.1} parent=1 // pred_check
      _
    $region3: #{tpu_custom_call.1} parent=1 // pred_check_branch
      %12 = sbr.rel (0) target = $region5
    $region4: #{tpu_custom_call.1} parent=1 // pred_region
      %s14 = ssub.s32 128, 128
      %15 = vsyncadd [#allocation4], %s14
      %s17 = sshll.u32 [#allocation3], 4
      %s18 = int_to_ptr.vmem [resolvable:$true] %s17
      %20 = dma.hbm_to_vmem [thread:$0]  %s0, 128, %s18, [#allocation4]
    $region5: #{tpu_custom_call.1} parent=1 // pred_fallthru
      _
    // Predicated region
    $region6: #{tpu_custom_call.1} parent=1 // pred_check
      _
    $region7: #{tpu_custom_call.1} parent=1 // pred_check_branch
      %22 = sbr.rel (0) target = $region9
    $region8: #{tpu_custom_call.1} parent=1 // pred_region
      %s24 = ssub.s32 128, 128
      %25 = vsyncadd [#allocation7], %s24
      %s27 = sshll.u32 [#allocation6], 4
      %s28 = int_to_ptr.vmem [resolvable:$true] %s27
      %30 = dma.hbm_to_vmem [thread:$0]  %s1, 128, %s28, [#allocation7]
    $region9: #{tpu_custom_call.1} parent=1 // pred_fallthru
      _
    // Predicated region
    $region10: #{tpu_custom_call.1} parent=1 // pred_check
      _
    $region11: #{tpu_custom_call.1} parent=1 // pred_check_branch
      %32 = sbr.rel (0) target = $region13
    $region12: #{tpu_custom_call.1} parent=1 // pred_region
      %s34 = ssub.s32 2048, 2048
      %35 = vsyncadd [#allocation7], %s34
      %s36 = sshll.u32 [#allocation8], 4
      %s37 = int_to_ptr.vmem [resolvable:$true] %s36
      %42 = dma.hbm_to_vmem [thread:$0]  %s2, 2048, %s37, [#allocation7], 128, 128, 8
    $region13: #{tpu_custom_call.1} parent=1 // pred_fallthru
      _
    // Predicated region
    $region14: #{tpu_custom_call.1} parent=1 // pred_check
      _
    $region15: #{tpu_custom_call.1} parent=1 // pred_check_branch
      %44 = sbr.rel (0) target = $region17
    $region16: #{tpu_custom_call.1} parent=1 // pred_region
      %45 = dma.done [#allocation4], 128
    $region17: #{tpu_custom_call.1} parent=1 // pred_fallthru
      _
    // Predicated region
    $region18: #{tpu_custom_call.1} parent=1 // pred_check
      _
    $region19: #{tpu_custom_call.1} parent=1 // pred_check_branch
      %47 = sbr.rel (0) target = $region21
    $region20: #{tpu_custom_call.1} parent=1 // pred_region
      %48 = dma.done [#allocation7], 128
    $region21: #{tpu_custom_call.1} parent=1 // pred_fallthru
      _
    // Predicated region
    $region22: #{tpu_custom_call.1} parent=1 // pred_check
      _
    $region23: #{tpu_custom_call.1} parent=1 // pred_check_branch
      %50 = sbr.rel (0) target = $region25
    $region24: #{tpu_custom_call.1} parent=1 // pred_region
      %51 = dma.done [#allocation7], 2048
    $region25: #{tpu_custom_call.1} parent=1 // pred_fallthru
      _
    %p52 = scmp.eq.s32.totalorder 0, 0
    // Predicated region
    $region26: #{tpu_custom_call.1} parent=1 // pred_check
      %p53 = pneg %p52
    $region27: #{tpu_custom_call.1} parent=1 // pred_check_branch
      %55 = sbr.rel (%p53) target = $region29
    $region28: #{tpu_custom_call.1} parent=1 // pred_region
      %56 = vst [vmem:[#allocation2] sm:$0xff] 0.0
    $region29: #{tpu_custom_call.1} parent=1 // pred_fallthru
      _
    %v57 = vld [vmem:[#allocation3] sm:$0xff]
    %v58 = vld [vmem:[#allocation6] sm:$0xff]
    %v59 = vadd.f32 %v57, %v58
    %v60 = vld [vmem:[#allocation2] sm:$0xff]
    %v61 = vld [vmem:[#allocation8] sm:$0xff]
    %v62 = vld [vmem:[#allocation8 + $0x8] sm:$0xff]
    %v63 = vld [vmem:[#allocation8 + $0x10] sm:$0xff]
    %v64 = vld [vmem:[#allocation8 + $0x18] sm:$0xff]
    %v65 = vld [vmem:[#allocation8 + $0x20] sm:$0xff]
    %v66 = vld [vmem:[#allocation8 + $0x28] sm:$0xff]
    %v67 = vld [vmem:[#allocation8 + $0x30] sm:$0xff]
    %v68 = vld [vmem:[#allocation8 + $0x38] sm:$0xff]
    %v69 = vld [vmem:[#allocation8 + $0x40] sm:$0xff]
    %v70 = vld [vmem:[#allocation8 + $0x48] sm:$0xff]
    %v71 = vld [vmem:[#allocation8 + $0x50] sm:$0xff]
    %v72 = vld [vmem:[#allocation8 + $0x58] sm:$0xff]
    %v73 = vld [vmem:[#allocation8 + $0x60] sm:$0xff]
    %v74 = vld [vmem:[#allocation8 + $0x68] sm:$0xff]
    %v75 = vld [vmem:[#allocation8 + $0x70] sm:$0xff]
    %v76 = vld [vmem:[#allocation8 + $0x78] sm:$0xff]
    %77 = vmatprep.subr.mxu0 0.0
    %78 = vmatpush1.msra.mxu0 %v76
    %79 = vmatprep.subr.mxu0 0.0
    %80 = vmatpush1.msra.mxu0 %v75
    %81 = vmatprep.subr.mxu0 0.0
    %82 = vmatpush1.msra.mxu0 %v74
    %83 = vmatprep.subr.mxu0 0.0
    %84 = vmatpush1.msra.mxu0 %v73
    %85 = vmatprep.subr.mxu0 0.0
    %86 = vmatpush1.msra.mxu0 %v72
    %87 = vmatprep.subr.mxu0 0.0
    %88 = vmatpush1.msra.mxu0 %v71
    %89 = vmatprep.subr.mxu0 0.0
    %90 = vmatpush1.msra.mxu0 %v70
    %91 = vmatprep.subr.mxu0 0.0
    %92 = vmatpush1.msra.mxu0 %v69
    %93 = vmatprep.subr.mxu0 0.0
    %94 = vmatpush1.msra.mxu0 %v68
    %95 = vmatprep.subr.mxu0 0.0
    %96 = vmatpush1.msra.mxu0 %v67
    %97 = vmatprep.subr.mxu0 0.0
    %98 = vmatpush1.msra.mxu0 %v66
    %99 = vmatprep.subr.mxu0 0.0
    %100 = vmatpush1.msra.mxu0 %v65
    %101 = vmatprep.subr.mxu0 0.0
    %102 = vmatpush1.msra.mxu0 %v64
    %103 = vmatprep.subr.mxu0 0.0
    %104 = vmatpush1.msra.mxu0 %v63
    %105 = vmatprep.subr.mxu0 0.0
    %106 = vmatpush1.msra.mxu0 %v62
    %107 = vmatprep.subr.mxu0 0.0
    %108 = vmatpush1.msra.mxu0 %v61
    %109 = vmatprep.subr.mxu0 0.0
    %110 = vmatpush2.msra.mxu0 0.0
    %111 = vmatprep.subr.mxu0 0.0
    %112 = vmatpush2.msra.mxu0 0.0
    %113 = vmatprep.subr.mxu0 0.0
    %114 = vmatpush2.msra.mxu0 0.0
    %115 = vmatprep.subr.mxu0 0.0
    %116 = vmatpush2.msra.mxu0 0.0
    %117 = vmatprep.subr.mxu0 0.0
    %118 = vmatpush2.msra.mxu0 0.0
    %119 = vmatprep.subr.mxu0 0.0
    %120 = vmatpush2.msra.mxu0 0.0
    %121 = vmatprep.subr.mxu0 0.0
    %122 = vmatpush2.msra.mxu0 0.0
    %123 = vmatprep.subr.mxu0 0.0
    %124 = vmatpush2.msra.mxu0 0.0
    %125 = vmatprep.subr.mxu0 0.0
    %126 = vmatpush2.msra.mxu0 0.0
    %127 = vmatprep.subr.mxu0 0.0
    %128 = vmatpush2.msra.mxu0 0.0
    %129 = vmatprep.subr.mxu0 0.0
    %130 = vmatpush2.msra.mxu0 0.0
    %131 = vmatprep.subr.mxu0 0.0
    %132 = vmatpush2.msra.mxu0 0.0
    %133 = vmatprep.subr.mxu0 0.0
    %134 = vmatpush2.msra.mxu0 0.0
    %135 = vmatprep.subr.mxu0 0.0
    %136 = vmatpush2.msra.mxu0 0.0
    %137 = vmatprep.subr.mxu0 0.0
    %138 = vmatpush2.msra.mxu0 0.0
    %139 = vmatprep.subr.mxu0 0.0
    %140 = vmatpush2.msra.mxu0 0.0
    %141 = vmatprep.mubr.f32.mxu0 0.0
    %142 = vmatmul.mubr.f32.gmra.mxu0 %v59
    %v143 = vpop.f32.mrf.mxu0
    %v144 = vadd.f32 0.0, %v143
    %v145 = vpop.f32.mrf.mxu0
    %146 = vdwg.mxu0
    %v147 = vadd.f32 %v60, %v144
    %148 = vst [vmem:[#allocation2] sm:$0xff] %v147
    // Predicated region
    $region30: #{tpu_custom_call.1} parent=1 // pred_check
      %p149 = pneg %p52
    $region31: #{tpu_custom_call.1} parent=1 // pred_check_branch
      %151 = sbr.rel (%p149) target = $region33
    $region32: #{tpu_custom_call.1} parent=1 // pred_region
      %v152 = vld [vmem:[#allocation2] sm:$0xff]
      %153 = vst [vmem:[#allocation9] sm:$0xff] %v152
    $region33: #{tpu_custom_call.1} parent=1 // pred_fallthru
      _
    // Predicated region
    $region34: #{tpu_custom_call.1} parent=1 // pred_check
      _
    $region35: #{tpu_custom_call.1} parent=1 // pred_check_branch
      %155 = sbr.rel (0) target = $region37
    $region36: #{tpu_custom_call.1} parent=1 // pred_region
      %s157 = ssub.s32 128, 128
      %158 = vsyncadd [#allocation5], %s157
      %s160 = sshll.u32 [#allocation9], 4
      %s161 = int_to_ptr.vmem [resolvable:$true] %s160
      %163 = dma.vmem_to_hbm [thread:$0]  %s161, 128, %s3, [#allocation5]
    $region37: #{tpu_custom_call.1} parent=1 // pred_fallthru
      _
    // Predicated region
    $region38: #{tpu_custom_call.1} parent=1 // pred_check
      _
    $region39: #{tpu_custom_call.1} parent=1 // pred_check_branch
      %165 = sbr.rel (0) target = $region41
    $region40: #{tpu_custom_call.1} parent=1 // pred_region
      %166 = dma.done [#allocation5], 128
    $region41: #{tpu_custom_call.1} parent=1 // pred_fallthru
      _
    %167 = vsyncpa [#allocation4], 1
    %168 = vsyncpa [#allocation7], 1
    %169 = vsyncpa [#allocation5], 1

</llo_original>
